<compile_context>
chip_gen: v5e
topology: v5e:2x2
jax: 0.10.0
libtpu: 0.0.40
codegen_flags: <defaults>
</compile_context>

<pallas_src>
import functools

import jax
import jax.numpy as jnp
from jax import lax
from jax.experimental import pallas as pl
from jax.experimental.pallas import tpu as pltpu


def _channel_gate_kernel(x_ref, w1t_ref, b1_ref, w2t_ref, b2_ref, o_ref, *, hw, hwp):
    """Fused ChannelGate for a block of Nb batch elements.

    x_ref  : (Nb, C, HWp)  feature slab, spatial flattened into the lane axis
                           (HWp = HW padded up to a multiple of 128)
    w1t_ref: (C, Ch)       Linear(C -> Ch) weight, transposed (row-vector MLP)
    b1_ref : (1, Ch)
    w2t_ref: (Ch, C)       Linear(Ch -> C) weight, transposed
    b2_ref : (1, C)
    o_ref  : (Nb, C, HWp)  same dtype as x
    """
    xb = x_ref[...]                              # native dtype (bf16 / f32)
    xf = xb.astype(jnp.float32)                  # stats & rescale math in f32

    # --- global avg/max pooling -------------------------------------------
    # Two-stage reduce: VPU accumulation over 128-lane chunks, then one
    # cross-lane (XLU) reduce per channel.
    if hw == hwp:
        xm = xf
    else:
        # Mask the zero padding out of the max (sum is unaffected by zeros).
        lane = lax.broadcasted_iota(jnp.int32, (1, 1, hwp), 2)
        xm = jnp.where(lane < hw, xf, -jnp.inf)

    acc_s = xf[..., 0:128]
    acc_m = xm[..., 0:128]
    for g in range(1, hwp // 128):
        lo = g * 128
        acc_s = acc_s + xf[..., lo:lo + 128]
        acc_m = jnp.maximum(acc_m, xm[..., lo:lo + 128])
    avg = jnp.sum(acc_s, axis=-1) * (1.0 / hw)   # (Nb, C) f32
    mx = jnp.max(acc_m, axis=-1)                 # (Nb, C) f32

    # --- shared MLP: both pool branches (x Nb elements) in one matmul pair --
    nb = avg.shape[0]
    v = jnp.concatenate([avg, mx], axis=0)                                  # (2*Nb, C)
    h = jnp.dot(v, w1t_ref[...], preferred_element_type=jnp.float32) + b1_ref[...]
    h = jnp.maximum(h, 0.0)                                                 # ReLU
    a = jnp.dot(h, w2t_ref[...], preferred_element_type=jnp.float32) + b2_ref[...]
    att = a[:nb] + a[nb:]                        # channel_att_sum, (Nb, C)

    # Numerically-stable sigmoid (no inf intermediate for large |att|).
    e = jnp.exp(-jnp.abs(att))
    scale = jnp.where(att >= 0.0, 1.0 / (1.0 + e), e / (1.0 + e))           # (Nb, C)

    # --- per-channel rescale; one lane-dense, unmasked store ----------------
    o_ref[...] = (xf * scale[:, :, None]).astype(o_ref.dtype)


def _choose_batch_block(n, c, hwp, itemsize, budget_bytes):
    """Largest divisor of n whose (Nb, C, HWp) block keeps ~4x block bytes
    (in + out, double-buffered) under `budget_bytes`, while leaving >= 2 grid
    steps when possible (v7x has two TensorCores sharing HBM)."""
    per_elem = c * hwp * itemsize
    cap = max(1, budget_bytes // (4 * per_elem))
    if n >= 2:
        cap = min(cap, max(1, n // 2))
    nb = 1
    for d in range(1, min(cap, n) + 1):
        if n % d == 0:
            nb = d
    return nb


def channel_gate(x_nchw, w1, b1, w2, b2, *, block_budget_bytes=4 << 20):
    """JAX/Pallas equivalent of ChannelGate.forward (pool_types=['avg','max'])."""
    N, C, H, W = x_nchw.shape
    Ch = w1.shape[0]
    assert w1.shape == (Ch, C) and w2.shape == (C, Ch)

    HW = H * W
    HWp = ((HW + 127) // 128) * 128              # lane-dense, unmasked vld/vst

    # Glue (plain JAX): keep x in its native dtype; spatial -> lane axis.
    x = x_nchw.reshape(N, C, HW)
    if HWp != HW:
        x = jnp.pad(x, ((0, 0), (0, 0), (0, HWp - HW)))

    # Tiny MLP parameters (f32), resident in VMEM via constant index_maps.
    w1t = jnp.asarray(w1, jnp.float32).T         # (C, Ch)
    w2t = jnp.asarray(w2, jnp.float32).T         # (Ch, C)
    b1r = jnp.asarray(b1, jnp.float32).reshape(1, Ch)
    b2r = jnp.asarray(b2, jnp.float32).reshape(1, C)

    Nb = _choose_batch_block(N, C, HWp, x.dtype.itemsize, block_budget_bytes)
    grid = (N // Nb,)

    kernel = functools.partial(_channel_gate_kernel, hw=HW, hwp=HWp)

    out = pl.pallas_call(
        kernel,
        out_shape=jax.ShapeDtypeStruct((N, C, HWp), x.dtype),
        grid_spec=pltpu.PrefetchScalarGridSpec(
            num_scalar_prefetch=0,
            grid=grid,
            in_specs=[
                pl.BlockSpec((Nb, C, HWp), lambda n: (n, 0, 0)),
                pl.BlockSpec((C, Ch), lambda n: (0, 0)),
                pl.BlockSpec((1, Ch), lambda n: (0, 0)),
                pl.BlockSpec((Ch, C), lambda n: (0, 0)),
                pl.BlockSpec((1, C), lambda n: (0, 0)),
            ],
            out_specs=pl.BlockSpec((Nb, C, HWp), lambda n: (n, 0, 0)),
        ),
        compiler_params=pltpu.CompilerParams(
            dimension_semantics=("parallel",),
            vmem_limit_bytes=32 << 20),
        # TODO(synk): if the caller no longer needs x, pass
        #   input_output_aliases={0: 0} so the output reuses x's HBM buffer.
    )(x, w1t, b1r, w2t, b2r)

    if HWp != HW:
        out = out[..., :HW]
    return out.reshape(N, C, H, W)


if __name__ == "__main__":
    key = jax.random.PRNGKey(0)
    k1, k2, k3, k4, k5 = jax.random.split(key, 5)

    # ChannelGate(gate_channels=32, reduction_ratio=8, pool_types=['avg','max'])
    N, C, H, W = 2, 32, 16, 16
    reduction_ratio = 8
    Ch = C // reduction_ratio

    x = jax.random.normal(k1, (N, C, H, W), jnp.float32)

    # Deterministic Linear parameters (PyTorch layout: weight is (out, in)).
    w1 = jax.random.normal(k2, (Ch, C), jnp.float32) / jnp.sqrt(C)
    b1 = 0.1 * jax.random.normal(k3, (Ch,), jnp.float32)
    w2 = jax.random.normal(k4, (C, Ch), jnp.float32) / jnp.sqrt(Ch)
    b2 = 0.1 * jax.random.normal(k5, (C,), jnp.float32)

    out = jax.block_until_ready(channel_gate(x, w1, b1, w2, b2))

    # Pure-JAX reference (avg/max global pooling + shared MLP + sigmoid gate).
    avg_pool = jnp.mean(x, axis=(2, 3))            # (N, C)
    max_pool = jnp.max(x, axis=(2, 3))             # (N, C)

    def mlp_ref(v):
        h = jnp.maximum(v @ w1.T + b1, 0.0)
        return h @ w2.T + b2

    scale_ref = jax.nn.sigmoid(mlp_ref(avg_pool) + mlp_ref(max_pool))
    ref = x * scale_ref[:, :, None, None]

    max_err = float(jnp.max(jnp.abs(out - ref)))
    assert out.shape == (N, C, H, W), out.shape
    assert out.dtype == x.dtype, out.dtype
    assert jnp.allclose(out, ref, atol=1e-4, rtol=1e-4), f"max_err={max_err}"

    # bf16 path smoke test: native dtype preserved end-to-end (half the DMA).
    x16 = x.astype(jnp.bfloat16)
    out16 = jax.block_until_ready(channel_gate(x16, w1, b1, w2, b2))
    assert out16.shape == (N, C, H, W)
    assert out16.dtype == jnp.bfloat16, out16.dtype
    assert bool(jnp.all(jnp.isfinite(out16.astype(jnp.float32))))

    print("KERNEL_OK")
</pallas_src>

<mosaic_0001>
module attributes {stable_mosaic.version = 11 : i64} {
  func.func @_channel_gate_kernel(%arg0: i32, %arg1: memref<1x32x256xf32, #tpu.memory_space<vmem>>, %arg2: memref<32x4xf32, #tpu.memory_space<vmem>>, %arg3: memref<1x4xf32, #tpu.memory_space<vmem>>, %arg4: memref<4x32xf32, #tpu.memory_space<vmem>>, %arg5: memref<1x32xf32, #tpu.memory_space<vmem>>, %arg6: memref<1x32x256xf32, #tpu.memory_space<vmem>>) attributes {dimension_semantics = [#tpu.dimension_semantics<parallel>], iteration_bounds = array<i64: 2>, scalar_prefetch = 0 : i64, scratch_operands = 0 : i64, tpu.core_type = #tpu.core_type<tc>, window_params = [{transform_indices = @transform_0, window_bounds = array<i64: 1, 32, 256>}, {pipeline_mode = #tpu.pipeline_mode<synchronous>, transform_indices = @transform_1, window_bounds = array<i64: 32, 4>}, {pipeline_mode = #tpu.pipeline_mode<synchronous>, transform_indices = @transform_2, window_bounds = array<i64: 1, 4>}, {pipeline_mode = #tpu.pipeline_mode<synchronous>, transform_indices = @transform_3, window_bounds = array<i64: 4, 32>}, {pipeline_mode = #tpu.pipeline_mode<synchronous>, transform_indices = @transform_4, window_bounds = array<i64: 1, 32>}, {transform_indices = @transform_5, window_bounds = array<i64: 1, 32, 256>}]} {
    %c0 = arith.constant 0 : index
    %c0_0 = arith.constant 0 : index
    %c0_1 = arith.constant 0 : index
    %0 = vector.load %arg1[%c0, %c0_0, %c0_1] : memref<1x32x256xf32, #tpu.memory_space<vmem>>, vector<1x32x256xf32>
    %1 = vector.extract_strided_slice %0 {offsets = [0, 0, 0], sizes = [1, 32, 128], strides = [1, 1, 1]} : vector<1x32x256xf32> to vector<1x32x128xf32>
    %2 = vector.extract_strided_slice %0 {offsets = [0, 0, 0], sizes = [1, 32, 128], strides = [1, 1, 1]} : vector<1x32x256xf32> to vector<1x32x128xf32>
    %3 = vector.extract_strided_slice %0 {offsets = [0, 0, 128], sizes = [1, 32, 128], strides = [1, 1, 1]} : vector<1x32x256xf32> to vector<1x32x128xf32>
    %4 = arith.addf %1, %3 : vector<1x32x128xf32>
    %5 = vector.extract_strided_slice %0 {offsets = [0, 0, 128], sizes = [1, 32, 128], strides = [1, 1, 1]} : vector<1x32x256xf32> to vector<1x32x128xf32>
    %6 = arith.maximumf %2, %5 : vector<1x32x128xf32>
    %cst = arith.constant dense<0.000000e+00> : vector<1x32xf32>
    %7 = vector.multi_reduction <add>, %4, %cst [2] : vector<1x32x128xf32> to vector<1x32xf32>
    %cst_2 = arith.constant 3.906250e-03 : f32
    %8 = vector.broadcast %cst_2 : f32 to vector<1x32xf32>
    %9 = arith.mulf %7, %8 : vector<1x32xf32>
    %cst_3 = arith.constant dense<0xFF800000> : vector<1x32xf32>
    %10 = vector.multi_reduction <maximumf>, %6, %cst_3 [2] : vector<1x32x128xf32> to vector<1x32xf32>
    %11 = tpu.concatenate %9, %10 in 0 : vector<1x32xf32>, vector<1x32xf32> -> vector<2x32xf32>
    %c0_4 = arith.constant 0 : index
    %c0_5 = arith.constant 0 : index
    %12 = vector.load %arg2[%c0_4, %c0_5] : memref<32x4xf32, #tpu.memory_space<vmem>>, vector<32x4xf32>
    %cst_6 = arith.constant dense<0.000000e+00> : vector<2x4xf32>
    %13 = tpu.matmul %11, %12, %cst_6 {dimension_numbers = #tpu.dot_dimension_numbers<[1], [0], [0], [1], [0, 0, 1, 1], [], []>} : vector<2x32xf32>, vector<32x4xf32>, vector<2x4xf32> -> vector<2x4xf32>
    %c0_7 = arith.constant 0 : index
    %c0_8 = arith.constant 0 : index
    %14 = vector.load %arg3[%c0_7, %c0_8] : memref<1x4xf32, #tpu.memory_space<vmem>>, vector<1x4xf32>
    %15 = vector.broadcast %14 : vector<1x4xf32> to vector<2x4xf32>
    %16 = arith.addf %13, %15 : vector<2x4xf32>
    %cst_9 = arith.constant 0.000000e+00 : f32
    %17 = vector.broadcast %cst_9 : f32 to vector<2x4xf32>
    %18 = arith.maximumf %16, %17 : vector<2x4xf32>
    %c0_10 = arith.constant 0 : index
    %c0_11 = arith.constant 0 : index
    %19 = vector.load %arg4[%c0_10, %c0_11] : memref<4x32xf32, #tpu.memory_space<vmem>>, vector<4x32xf32>
    %cst_12 = arith.constant dense<0.000000e+00> : vector<2x32xf32>
    %20 = tpu.matmul %18, %19, %cst_12 {dimension_numbers = #tpu.dot_dimension_numbers<[1], [0], [0], [1], [0, 0, 1, 1], [], []>} : vector<2x4xf32>, vector<4x32xf32>, vector<2x32xf32> -> vector<2x32xf32>
    %c0_13 = arith.constant 0 : index
    %c0_14 = arith.constant 0 : index
    %21 = vector.load %arg5[%c0_13, %c0_14] : memref<1x32xf32, #tpu.memory_space<vmem>>, vector<1x32xf32>
    %22 = vector.broadcast %21 : vector<1x32xf32> to vector<2x32xf32>
    %23 = arith.addf %20, %22 : vector<2x32xf32>
    %24 = vector.extract_strided_slice %23 {offsets = [0, 0], sizes = [1, 32], strides = [1, 1]} : vector<2x32xf32> to vector<1x32xf32>
    %25 = vector.extract_strided_slice %23 {offsets = [1, 0], sizes = [1, 32], strides = [1, 1]} : vector<2x32xf32> to vector<1x32xf32>
    %26 = arith.addf %24, %25 : vector<1x32xf32>
    %27 = math.absf %26 : vector<1x32xf32>
    %cst_15 = arith.constant 0.000000e+00 : f32
    %28 = vector.broadcast %cst_15 : f32 to vector<1x32xf32>
    %29 = arith.subf %28, %27 : vector<1x32xf32>
    %30 = math.exp %29 : vector<1x32xf32>
    %cst_16 = arith.constant 0.000000e+00 : f32
    %31 = vector.broadcast %cst_16 : f32 to vector<1x32xf32>
    %32 = arith.cmpf oge, %26, %31 : vector<1x32xf32>
    %cst_17 = arith.constant 1.000000e+00 : f32
    %33 = vector.broadcast %cst_17 : f32 to vector<1x32xf32>
    %34 = arith.addf %33, %30 : vector<1x32xf32>
    %cst_18 = arith.constant 1.000000e+00 : f32
    %35 = vector.broadcast %cst_18 : f32 to vector<1x32xf32>
    %36 = arith.divf %35, %34 : vector<1x32xf32>
    %cst_19 = arith.constant 1.000000e+00 : f32
    %37 = vector.broadcast %cst_19 : f32 to vector<1x32xf32>
    %38 = arith.addf %37, %30 : vector<1x32xf32>
    %39 = arith.divf %30, %38 : vector<1x32xf32>
    %40 = arith.select %32, %36, %39 : vector<1x32xi1>, vector<1x32xf32>
    %41 = vector.shape_cast %40 : vector<1x32xf32> to vector<1x32x1xf32>
    %42 = vector.broadcast %41 : vector<1x32x1xf32> to vector<1x32x256xf32>
    %43 = arith.mulf %0, %42 : vector<1x32x256xf32>
    %c0_20 = arith.constant 0 : index
    %c0_21 = arith.constant 0 : index
    %c0_22 = arith.constant 0 : index
    %44 = vector.load %arg6[%c0_20, %c0_21, %c0_22] : memref<1x32x256xf32, #tpu.memory_space<vmem>>, vector<1x32x256xf32>
    tpu.vector_store %arg6[%c0_20, %c0_21, %c0_22], %43 {strides = array<i32>} : memref<1x32x256xf32, #tpu.memory_space<vmem>>, vector<1x32x256xf32>,
    return
  }
  func.func @transform_0(%arg0: i32) -> (i32, i32, i32) {
    %c0_i32 = arith.constant 0 : i32
    %c0_i32_0 = arith.constant 0 : i32
    %c0_i32_1 = arith.constant 0 : i32
    return %arg0, %c0_i32, %c0_i32_0 : i32, i32, i32
  }
  func.func @transform_1(%arg0: i32) -> (i32, i32) {
    %c0_i32 = arith.constant 0 : i32
    %c0_i32_0 = arith.constant 0 : i32
    %c0_i32_1 = arith.constant 0 : i32
    return %c0_i32, %c0_i32_0 : i32, i32
  }
  func.func @transform_2(%arg0: i32) -> (i32, i32) {
    %c0_i32 = arith.constant 0 : i32
    %c0_i32_0 = arith.constant 0 : i32
    %c0_i32_1 = arith.constant 0 : i32
    return %c0_i32, %c0_i32_0 : i32, i32
  }
  func.func @transform_3(%arg0: i32) -> (i32, i32) {
    %c0_i32 = arith.constant 0 : i32
    %c0_i32_0 = arith.constant 0 : i32
    %c0_i32_1 = arith.constant 0 : i32
    return %c0_i32, %c0_i32_0 : i32, i32
  }
  func.func @transform_4(%arg0: i32) -> (i32, i32) {
    %c0_i32 = arith.constant 0 : i32
    %c0_i32_0 = arith.constant 0 : i32
    %c0_i32_1 = arith.constant 0 : i32
    return %c0_i32, %c0_i32_0 : i32, i32
  }
  func.func @transform_5(%arg0: i32) -> (i32, i32, i32) {
    %c0_i32 = arith.constant 0 : i32
    %c0_i32_0 = arith.constant 0 : i32
    %c0_i32_1 = arith.constant 0 : i32
    return %arg0, %c0_i32, %c0_i32_0 : i32, i32, i32
  }
}

</mosaic_0001>

<llo_original>
// kernel: tpu_custom_call.1
$region0: #{tpu_custom_call.1}
  #allocation0 [shape = 'u32[]', space=smem, size = 0x4, offset = 0x4, fixed_abs, tag = 'smem constant byte address 0x4 - core index']
  #allocation1 [shape = 'u32[72,128]{1,0:T(1,128)}', space=vmem, size = 0x9000, scoped, tag = 'internal scratch']
  %s0 = inlined_call_operand.hbm [shape: f32[2,32,256], index: 0, kind: input, shape index: {}]
  %s1 = inlined_call_operand.vmem [shape: f32[32,4], index: 1, kind: input, shape index: {}]
  %s2 = inlined_call_operand.vmem [shape: f32[1,4], index: 2, kind: input, shape index: {}]
  %s3 = inlined_call_operand.vmem [shape: f32[4,32], index: 3, kind: input, shape index: {}]
  %s4 = inlined_call_operand.vmem [shape: f32[1,32], index: 4, kind: input, shape index: {}]
  %s5 = inlined_call_operand.hbm [shape: f32[2,32,256], index: 5, kind: output, shape index: {}]
  %s6 = sld [smem:[#allocation0]]
  $region57: #{tpu_custom_call.1} parent=0
    _
  %s8 = ssub.s32 1, %s6
  %s9 = scalar_select 0, %s8, %s6
  $region1: #{tpu_custom_call.1} parent=0
    #allocation2 [shape = 'u8[65536]{0}', space=vmem, size = 0x10000, scoped, tag = 'input window, operand 0']
    #allocation3 [shape = 's32[2]{0}', space=sflag, size = 0x8, scoped, tag = 'scoped memory for tpu_custom_call.1']
    #allocation4 [shape = 's32[2]{0}', space=sflag, size = 0x8, scoped, tag = 'scoped memory for tpu_custom_call.1']
    #allocation5 [shape = 'u8[65536]{0}', space=vmem, size = 0x10000, scoped, tag = 'output window, operand 0']
    %10 = vsyncpa [#allocation3], 0
    %s11 = scalar_lea.sflag [#allocation3], 1
    %12 = vsyncpa %s11, 0
    %13 = vsyncpa [#allocation4], 0
    %s14 = scalar_lea.sflag [#allocation4], 1
    %15 = vsyncpa %s14, 0
    loop: start=0, step=1, limit=4
    $region2: #{tpu_custom_call.1} parent=1 // loop_pre_header
      _
    $region3: #{tpu_custom_call.1} parent=1 // loop_header
      %s17 = sphi 0, %s21
      %p18 = scmp.ge.s32.totalorder %s17, 4
      %s27 = sphi 0, %s29
      %s30 = sphi 0, %s27
      %s31 = sphi 0, %s30
      %s47 = sphi 0, %s31
      %s51 = sphi 0, %s51
      %s53 = sphi 0, %s51
      %s54 = sphi 0, %s53
      %s68 = sphi 0, %s54
      %s72 = sphi 0, %s72
      %s74 = sphi 0, %s72
      %s75 = sphi 0, %s74
      %s89 = sphi 0, %s75
      %s93 = sphi 0, %s93
      %s95 = sphi 0, %s93
      %s96 = sphi 0, %s95
      %s110 = sphi 0, %s96
      %s114 = sphi 0, %s114
      %s116 = sphi 0, %s114
      %s117 = sphi 0, %s116
      %s131 = sphi 0, %s117
      %s137 = sphi 0, %s139
      %s140 = sphi 0, %s137
      %s141 = sphi 0, %s140
      %s157 = sphi 0, %s141
    $region4: #{tpu_custom_call.1} parent=1 // loop_header_branch
      %20 = sbr.rel (%p18) target = $region8
    $region5: #{tpu_custom_call.1} parent=1 // loop_body
      %s22 = ssub.s32 %s17, 1
      %s23 = ssub.s32 %s17, 2
      %s24 = sadd.s32 %s17, 1
      %s25 = ssub.s32 %s17, %s24
      %p26 = scmp.eq.s32.totalorder %s25, 0
      %s28 = sadd.s32 %s27, 1
      %s29 = scalar_select %p26, %s27, %s28
      %p32 = pneg %p26
      %p33 = scmp.eq.s32.totalorder %s17, 1
      %p34 = por %p32, %p33
      %p35 = scmp.ne.s32.totalorder %s27, %s30
      %p36 = scmp.eq.s32.totalorder %s17, 0
      %p37 = por %p35, %p36
      %p38 = scmp.ne.s32.totalorder %s27, %s30
      %p39 = scmp.eq.s32.totalorder %s22, 1
      %p40 = por %p38, %p39
      %p41 = scmp.ne.s32.totalorder %s30, %s31
      %p42 = scmp.eq.s32.totalorder %s22, 0
      %p43 = por %p41, %p42
      %p44 = scmp.ne.s32.totalorder %s30, %s31
      %p45 = scmp.eq.s32.totalorder %s23, 1
      %p46 = por %p44, %p45
      %p48 = scmp.ne.s32.totalorder %s31, %s47
      %p49 = scmp.eq.s32.totalorder %s23, 0
      %p50 = por %p48, %p49
      %s52 = sadd.s32 %s51, 1
      %p55 = scmp.eq.s32.totalorder %s17, 1
      %p56 = scmp.ne.s32.totalorder %s51, %s53
      %p57 = scmp.eq.s32.totalorder %s17, 0
      %p58 = por %p56, %p57
      %p59 = scmp.ne.s32.totalorder %s51, %s53
      %p60 = scmp.eq.s32.totalorder %s22, 1
      %p61 = por %p59, %p60
      %p62 = scmp.ne.s32.totalorder %s53, %s54
      %p63 = scmp.eq.s32.totalorder %s22, 0
      %p64 = por %p62, %p63
      %p65 = scmp.ne.s32.totalorder %s53, %s54
      %p66 = scmp.eq.s32.totalorder %s23, 1
      %p67 = por %p65, %p66
      %p69 = scmp.ne.s32.totalorder %s54, %s68
      %p70 = scmp.eq.s32.totalorder %s23, 0
      %p71 = por %p69, %p70
      %s73 = sadd.s32 %s72, 1
      %p76 = scmp.eq.s32.totalorder %s17, 1
      %p77 = scmp.ne.s32.totalorder %s72, %s74
      %p78 = scmp.eq.s32.totalorder %s17, 0
      %p79 = por %p77, %p78
      %p80 = scmp.ne.s32.totalorder %s72, %s74
      %p81 = scmp.eq.s32.totalorder %s22, 1
      %p82 = por %p80, %p81
      %p83 = scmp.ne.s32.totalorder %s74, %s75
      %p84 = scmp.eq.s32.totalorder %s22, 0
      %p85 = por %p83, %p84
      %p86 = scmp.ne.s32.totalorder %s74, %s75
      %p87 = scmp.eq.s32.totalorder %s23, 1
      %p88 = por %p86, %p87
      %p90 = scmp.ne.s32.totalorder %s75, %s89
      %p91 = scmp.eq.s32.totalorder %s23, 0
      %p92 = por %p90, %p91
      %s94 = sadd.s32 %s93, 1
      %p97 = scmp.eq.s32.totalorder %s17, 1
      %p98 = scmp.ne.s32.totalorder %s93, %s95
      %p99 = scmp.eq.s32.totalorder %s17, 0
      %p100 = por %p98, %p99
      %p101 = scmp.ne.s32.totalorder %s93, %s95
      %p102 = scmp.eq.s32.totalorder %s22, 1
      %p103 = por %p101, %p102
      %p104 = scmp.ne.s32.totalorder %s95, %s96
      %p105 = scmp.eq.s32.totalorder %s22, 0
      %p106 = por %p104, %p105
      %p107 = scmp.ne.s32.totalorder %s95, %s96
      %p108 = scmp.eq.s32.totalorder %s23, 1
      %p109 = por %p107, %p108
      %p111 = scmp.ne.s32.totalorder %s96, %s110
      %p112 = scmp.eq.s32.totalorder %s23, 0
      %p113 = por %p111, %p112
      %s115 = sadd.s32 %s114, 1
      %p118 = scmp.eq.s32.totalorder %s17, 1
      %p119 = scmp.ne.s32.totalorder %s114, %s116
      %p120 = scmp.eq.s32.totalorder %s17, 0
      %p121 = por %p119, %p120
      %p122 = scmp.ne.s32.totalorder %s114, %s116
      %p123 = scmp.eq.s32.totalorder %s22, 1
      %p124 = por %p122, %p123
      %p125 = scmp.ne.s32.totalorder %s116, %s117
      %p126 = scmp.eq.s32.totalorder %s22, 0
      %p127 = por %p125, %p126
      %p128 = scmp.ne.s32.totalorder %s116, %s117
      %p129 = scmp.eq.s32.totalorder %s23, 1
      %p130 = por %p128, %p129
      %p132 = scmp.ne.s32.totalorder %s117, %s131
      %p133 = scmp.eq.s32.totalorder %s23, 0
      %p134 = por %p132, %p133
      %s135 = ssub.s32 %s17, %s24
      %p136 = scmp.eq.s32.totalorder %s135, 0
      %s138 = sadd.s32 %s137, 1
      %s139 = scalar_select %p136, %s137, %s138
      %p142 = pneg %p136
      %p143 = scmp.eq.s32.totalorder %s17, 1
      %p144 = por %p142, %p143
      %p145 = scmp.ne.s32.totalorder %s137, %s140
      %p146 = scmp.eq.s32.totalorder %s17, 0
      %p147 = por %p145, %p146
      %p148 = scmp.ne.s32.totalorder %s137, %s140
      %p149 = scmp.eq.s32.totalorder %s22, 1
      %p150 = por %p148, %p149
      %p151 = scmp.ne.s32.totalorder %s140, %s141
      %p152 = scmp.eq.s32.totalorder %s22, 0
      %p153 = por %p151, %p152
      %p154 = scmp.ne.s32.totalorder %s140, %s141
      %p155 = scmp.eq.s32.totalorder %s23, 1
      %p156 = por %p154, %p155
      %p158 = scmp.ne.s32.totalorder %s141, %s157
      %p159 = scmp.eq.s32.totalorder %s23, 0
      %p160 = por %p158, %p159
      %p161 = scmp.le.s32.totalorder 1, %s17
      %p162 = scmp.lt.s32.totalorder %s17, 3
      %p163 = pnand %p161, %p162
      %p164 = pneg %p163
      // Predicated region
      $region9: #{tpu_custom_call.1} parent=5 // pred_check
        _
      $region10: #{tpu_custom_call.1} parent=5 // pred_check_branch
        %166 = sbr.rel (%p163) target = $region12
      $region11: #{tpu_custom_call.1} parent=5 // pred_region
        %s167 = ssub.s32 %s17, 1
        // Predicated region
        $region13: #{tpu_custom_call.1} parent=11 // pred_check
          %p168 = pneg %p64
        $region14: #{tpu_custom_call.1} parent=11 // pred_check_branch
          %170 = sbr.rel (%p168) target = $region16
        $region15: #{tpu_custom_call.1} parent=11 // pred_region
          _
        $region16: #{tpu_custom_call.1} parent=11 // pred_fallthru
          _
        // Predicated region
        $region17: #{tpu_custom_call.1} parent=11 // pred_check
          %p171 = pneg %p85
        $region18: #{tpu_custom_call.1} parent=11 // pred_check_branch
          %173 = sbr.rel (%p171) target = $region20
        $region19: #{tpu_custom_call.1} parent=11 // pred_region
          _
        $region20: #{tpu_custom_call.1} parent=11 // pred_fallthru
          _
        // Predicated region
        $region21: #{tpu_custom_call.1} parent=11 // pred_check
          %p174 = pneg %p106
        $region22: #{tpu_custom_call.1} parent=11 // pred_check_branch
          %176 = sbr.rel (%p174) target = $region24
        $region23: #{tpu_custom_call.1} parent=11 // pred_region
          _
        $region24: #{tpu_custom_call.1} parent=11 // pred_fallthru
          _
        // Predicated region
        $region25: #{tpu_custom_call.1} parent=11 // pred_check
          %p177 = pneg %p127
        $region26: #{tpu_custom_call.1} parent=11 // pred_check_branch
          %179 = sbr.rel (%p177) target = $region28
        $region27: #{tpu_custom_call.1} parent=11 // pred_region
          _
        $region28: #{tpu_custom_call.1} parent=11 // pred_fallthru
          _
      $region12: #{tpu_custom_call.1} parent=5 // pred_fallthru
        _
      %p180 = scmp.lt.s32.totalorder %s17, 2
      // Predicated region
      $region29: #{tpu_custom_call.1} parent=5 // pred_check
        %p181 = pneg %p180
      $region30: #{tpu_custom_call.1} parent=5 // pred_check_branch
        %183 = sbr.rel (%p181) target = $region32
      $region31: #{tpu_custom_call.1} parent=5 // pred_region
        // Predicated region
        $region33: #{tpu_custom_call.1} parent=31 // pred_check
          %p184 = pneg %p37
        $region34: #{tpu_custom_call.1} parent=31 // pred_check_branch
          %186 = sbr.rel (%p184) target = $region36
        $region35: #{tpu_custom_call.1} parent=31 // pred_region
          %s187 = sand.u32 %s27, 1
          %s188 = scalar_lea.sflag [#allocation3], %s187
          %s189 = sand.u32 %s27, 1
          %s190 = smul.addr %s189, 64
          %s191 = scalar_lea.vmem [#allocation2], %s190
          %193 = vsyncadd %s188, 0
          %s194 = smul.addr %s17, 8
          %s195 = smul.addr %s194, 8
          %s196 = scalar_lea.hbm %s0, %s195
          %s197 = sshll.u32 %s196, 4
          %s198 = int_to_ptr.hbm [resolvable:$true] %s197
          %s199 = sshll.u32 %s191, 4
          %s200 = int_to_ptr.vmem [resolvable:$true] %s199
          %205 = dma.hbm_to_vmem [thread:$0]  %s198, 1024, %s200, %s188, 256, 256, 16
        $region36: #{tpu_custom_call.1} parent=31 // pred_fallthru
          _
      $region32: #{tpu_custom_call.1} parent=5 // pred_fallthru
        _
      %p206 = scmp.le.s32.totalorder 1, %s17
      %p207 = scmp.lt.s32.totalorder %s17, 3
      %p208 = pnand %p206, %p207
      %p209 = pneg %p208
      // Predicated region
      $region37: #{tpu_custom_call.1} parent=5 // pred_check
        _
      $region38: #{tpu_custom_call.1} parent=5 // pred_check_branch
        %211 = sbr.rel (%p208) target = $region40
      $region39: #{tpu_custom_call.1} parent=5 // pred_region
        %s212 = ssub.s32 %s17, 1
        %s213 = sand.u32 %s30, 1
        %s214 = scalar_lea.sflag [#allocation3], %s213
        %s215 = sand.u32 %s30, 1
        %s216 = smul.addr %s215, 64
        %s217 = scalar_lea.vmem [#allocation2], %s216
        // Predicated region
        $region41: #{tpu_custom_call.1} parent=39 // pred_check
          %p218 = pneg %p43
        $region42: #{tpu_custom_call.1} parent=39 // pred_check_branch
          %220 = sbr.rel (%p218) target = $region44
        $region43: #{tpu_custom_call.1} parent=39 // pred_region
          %222 = dma.done %s214, 1024
        $region44: #{tpu_custom_call.1} parent=39 // pred_fallthru
          _
        %s223 = sand.u32 %s30, 1
        %s224 = scalar_lea.sflag [#allocation3], %s223
        %s225 = sand.u32 %s30, 1
        %s226 = smul.addr %s225, 64
        %s227 = scalar_lea.vmem [#allocation2], %s226
        %p228 = pneg %p43
        %p229 = pneg %p40
        %p230 = pneg %p64
        %p231 = pneg %p61
        %p232 = pneg %p85
        %p233 = pneg %p82
        %p234 = pneg %p106
        %p235 = pneg %p103
        %p236 = pneg %p127
        %p237 = pneg %p124
        %p238 = pneg %p153
        %p239 = pneg %p150
        %s240 = sand.u32 %s140, 1
        %s241 = scalar_lea.sflag [#allocation4], %s240
        %s242 = sand.u32 %s140, 1
        %s243 = smul.addr %s242, 64
        %s244 = scalar_lea.vmem [#allocation5], %s243
        %v245 = vld [vmem:[%s217] sm:$0xff]
        %v246 = vld [vmem:[%s217 + $0x8] sm:$0xff]
        %v247 = vld [vmem:[%s217 + $0x10] sm:$0xff]
        %v248 = vld [vmem:[%s217 + $0x18] sm:$0xff]
        %v249 = vld [vmem:[%s217 + $0x20] sm:$0xff]
        %v250 = vld [vmem:[%s217 + $0x28] sm:$0xff]
        %v251 = vld [vmem:[%s217 + $0x30] sm:$0xff]
        %v252 = vld [vmem:[%s217 + $0x38] sm:$0xff]
        %v253 = vadd.f32 %v245, %v246
        %v254 = vadd.f32 %v247, %v248
        %v255 = vadd.f32 %v249, %v250
        %v256 = vadd.f32 %v251, %v252
        %v257 = vmax.f32 %v245, %v246
        %v258 = vmax.f32 %v247, %v248
        %v259 = vmax.f32 %v249, %v250
        %v260 = vmax.f32 %v251, %v252
        %261 = vadd.xlane.f32.xlu0 %v253
        %v262 = vpop.xlane.xlu0 %261
        %263 = vadd.xlane.f32.xlu0 %v254
        %v264 = vpop.xlane.xlu0 %263
        %265 = vadd.xlane.f32.xlu0 %v255
        %v266 = vpop.xlane.xlu0 %265
        %267 = vadd.xlane.f32.xlu0 %v256
        %v268 = vpop.xlane.xlu0 %267
        %v269 = vmul.f32 %v262, 0.00390625
        %v270 = vmul.f32 %v264, 0.00390625
        %v271 = vmul.f32 %v266, 0.00390625
        %v272 = vmul.f32 %v268, 0.00390625
        %273 = vmax.xlane.f32.xlu0 %v257
        %v274 = vpop.xlane.xlu0 %273
        %275 = vmax.xlane.f32.xlu0 %v258
        %v276 = vpop.xlane.xlu0 %275
        %277 = vmax.xlane.f32.xlu0 %v259
        %v278 = vpop.xlane.xlu0 %277
        %279 = vmax.xlane.f32.xlu0 %v260
        %v280 = vpop.xlane.xlu0 %279
        %v285 = vlaneseq
        %v286 = vand.u32 %v285, 127
        %v287 = vperm.slane %v269, %v286
        %v288 = vadd.s32 %v286, 4294967288
        %v289 = vperm.slane %v270, %v288
        %vm290 = vcmask 130112
        %v291 = vsel %vm290, %v289, %v287
        %v292 = vadd.s32 %v286, 4294967280
        %v293 = vperm.slane %v271, %v292
        %vm294 = vcmask 195712
        %v295 = vsel %vm294, %v293, %v291
        %v296 = vadd.s32 %v286, 4294967272
        %v297 = vperm.slane %v272, %v296
        %vm298 = vcmask 261312
        %v299 = vsel %vm298, %v297, %v295
        %v305 = vperm.slane %v274, %v286
        %v306 = vperm.slane %v276, %v288
        %v307 = vsel %vm290, %v306, %v305
        %v308 = vperm.slane %v278, %v292
        %v309 = vsel %vm294, %v308, %v307
        %v310 = vperm.slane %v280, %v296
        %v311 = vsel %vm298, %v310, %v309
        %vm313 = vcmask 1040384
        %v314 = vsel %vm313, %v299, %v311
        %v315 = vld [vmem:[%s1] sm:$0xff]
        %v316 = vld [vmem:[%s1 + $0x8] sm:$0xff]
        %v317 = vld [vmem:[%s1 + $0x10] sm:$0xff]
        %v318 = vld [vmem:[%s1 + $0x18] sm:$0xff]
        %v319 = vld [vmem:[%s2] sm:$0x1]
        %v321 = vperm.slane %v319, 0
        %vm323 = vcmask 261120
        %v325 = vsel %vm323, %v314, 0
        %327 = vmatpush.msra.mxu0 0.0
        %328 = vmatpush.msra.mxu0 0.0
        %329 = vmatpush.msra.mxu0 0.0
        %330 = vmatpush.msra.mxu0 0.0
        %331 = vmatpush.msra.mxu0 0.0
        %332 = vmatpush.msra.mxu0 0.0
        %333 = vmatpush.msra.mxu0 0.0
        %334 = vmatpush.msra.mxu0 0.0
        %335 = vmatpush.msra.mxu0 0.0
        %336 = vmatpush.msra.mxu0 0.0
        %337 = vmatpush.msra.mxu0 0.0
        %338 = vmatpush.msra.mxu0 0.0
        %339 = vmatpush.msra.mxu0 %v318
        %340 = vmatpush.msra.mxu0 %v317
        %341 = vmatpush.msra.mxu0 %v316
        %342 = vmatpush.msra.mxu0 %v315
        %343 = vmatmul.f32.gmra.mxu0 %v325
        %v344 = vpop.f32.mrf.mxu0
        %v345 = vadd.f32 %v321, %v344
        %346 = vdwg.mxu0
        %v347 = vmax.f32 %v345, 0.0
        %v348 = vld [vmem:[%s3] sm:$0xf]
        %v349 = vld [vmem:[%s4] sm:$0x1]
        %v351 = vperm.slane %v349, 0
        %vm353 = vcmask 31744
        %v355 = vsel %vm353, %v347, 0
        %vm357 = vcmask 1043456
        %v359 = vsel %vm357, %v348, 0
        %361 = vmatpush.msra.mxu0 0.0
        %362 = vmatpush.msra.mxu0 0.0
        %363 = vmatpush.msra.mxu0 0.0
        %364 = vmatpush.msra.mxu0 0.0
        %365 = vmatpush.msra.mxu0 0.0
        %366 = vmatpush.msra.mxu0 0.0
        %367 = vmatpush.msra.mxu0 0.0
        %368 = vmatpush.msra.mxu0 0.0
        %369 = vmatpush.msra.mxu0 0.0
        %370 = vmatpush.msra.mxu0 0.0
        %371 = vmatpush.msra.mxu0 0.0
        %372 = vmatpush.msra.mxu0 0.0
        %373 = vmatpush.msra.mxu0 0.0
        %374 = vmatpush.msra.mxu0 0.0
        %375 = vmatpush.msra.mxu0 0.0
        %376 = vmatpush.msra.mxu0 %v359
        %377 = vmatmul.f32.gmra.mxu0 %v355
        %v378 = vpop.f32.mrf.mxu0
        %v379 = vadd.f32 %v351, %v378
        %380 = vdwg.mxu0
        %v382 = vrot.slane %v379, 1
        %v384 = vadd.f32 %v379, %v382
        %v385 = vand.u32 2147483647, %v384
        %v386 = vsub.f32 0.0, %v385
        %v387 = vmul.f32 %v386, 1.442695
        %v388 = vpow.pop %v387
        %vm389 = vcmp.ge.f32.partialorder %v384, 0.0
        %v390 = vadd.f32 %v388, 1.0
        %v391 = vrcp.pop %v390
        %v392 = vmul.f32 %v390, %v391
        %v393 = vsub.f32 1.0, %v392
        %v394 = vmul.f32 %v391, %v393
        %v395 = vadd.f32 %v391, %v394
        %vm396 = vweird.f32 %v390
        %vm397 = vweird.f32 %v391
        %vm398 = vmor %vm396, %vm397
        %v399 = vsel %vm398, %v391, %v395
        %v400 = vand.u32 2147483647, %v390
        %vm401 = vcmp.eq.f32.partialorder %v400, 8.507059e+37
        %v402 = vand.u32 %v390, 2147483648
        %v403 = vor.u32 1.1754944e-38, %v402
        %v404 = vsel %vm401, %v403, %v399
        %v405 = vmul.f32 1.0, %v404
        %v406 = vmul.f32 %v388, %v404
        %v407 = vsel %vm389, %v405, %v406
        %v408 = vperm.slane %v407, 0
        %v409 = vlaneseq
        %v410 = vshrl.u32 %v409, 7
        %412 = vset.pattern.permute.xlu0 %v410
        %413 = vperm.xlu0 %412, %v408
        %v414 = vpop.permute.xlu0 %413
        %v415 = vlaneseq
        %v416 = vshrl.u32 %v415, 7
        %v417 = vadd.s32 %v416, 8
        %418 = vset.pattern.permute.xlu0 %v417
        %419 = vperm.xlu0 %418, %v408
        %v420 = vpop.permute.xlu0 %419
        %v421 = vlaneseq
        %v422 = vshrl.u32 %v421, 7
        %v423 = vadd.s32 %v422, 16
        %424 = vset.pattern.permute.xlu0 %v423
        %425 = vperm.xlu0 %424, %v408
        %v426 = vpop.permute.xlu0 %425
        %v427 = vlaneseq
        %v428 = vshrl.u32 %v427, 7
        %v429 = vadd.s32 %v428, 24
        %430 = vset.pattern.permute.xlu0 %v429
        %431 = vperm.xlu0 %430, %v408
        %v432 = vpop.permute.xlu0 %431
        %v433 = vmul.f32 %v245, %v414
        %v434 = vmul.f32 %v246, %v414
        %v435 = vmul.f32 %v247, %v420
        %v436 = vmul.f32 %v248, %v420
        %v437 = vmul.f32 %v249, %v426
        %v438 = vmul.f32 %v250, %v426
        %v439 = vmul.f32 %v251, %v432
        %v440 = vmul.f32 %v252, %v432
        %441 = vst [vmem:[%s244] sm:$0xff] %v433
        %442 = vst [vmem:[%s244 + $0x8] sm:$0xff] %v434
        %443 = vst [vmem:[%s244 + $0x10] sm:$0xff] %v435
        %444 = vst [vmem:[%s244 + $0x18] sm:$0xff] %v436
        %445 = vst [vmem:[%s244 + $0x20] sm:$0xff] %v437
        %446 = vst [vmem:[%s244 + $0x28] sm:$0xff] %v438
        %447 = vst [vmem:[%s244 + $0x30] sm:$0xff] %v439
        %448 = vst [vmem:[%s244 + $0x38] sm:$0xff] %v440
        %s449 = sand.u32 %s140, 1
        %s450 = scalar_lea.sflag [#allocation4], %s449
        %s451 = sand.u32 %s140, 1
        %s452 = smul.addr %s451, 64
        %s453 = scalar_lea.vmem [#allocation5], %s452
        // Predicated region
        $region45: #{tpu_custom_call.1} parent=39 // pred_check
          %p454 = pneg %p150
        $region46: #{tpu_custom_call.1} parent=39 // pred_check_branch
          %456 = sbr.rel (%p454) target = $region48
        $region47: #{tpu_custom_call.1} parent=39 // pred_region
          %458 = vsyncadd %s450, 0
          %s459 = smul.addr %s22, 8
          %s460 = smul.addr %s459, 8
          %s461 = scalar_lea.hbm %s5, %s460
          %s462 = sshll.u32 %s453, 4
          %s463 = int_to_ptr.vmem [resolvable:$true] %s462
          %s464 = sshll.u32 %s461, 4
          %s465 = int_to_ptr.hbm [resolvable:$true] %s464
          %470 = dma.vmem_to_hbm [thread:$0]  %s463, 1024, %s465, %s450, 256, 256, 16
        $region48: #{tpu_custom_call.1} parent=39 // pred_fallthru
          _
      $region40: #{tpu_custom_call.1} parent=5 // pred_fallthru
        _
      %p471 = scmp.le.s32.totalorder 2, %s17
      // Predicated region
      $region49: #{tpu_custom_call.1} parent=5 // pred_check
        %p472 = pneg %p471
      $region50: #{tpu_custom_call.1} parent=5 // pred_check_branch
        %474 = sbr.rel (%p472) target = $region52
      $region51: #{tpu_custom_call.1} parent=5 // pred_region
        %s475 = ssub.s32 %s17, 2
        // Predicated region
        $region53: #{tpu_custom_call.1} parent=51 // pred_check
          %p476 = pneg %p156
        $region54: #{tpu_custom_call.1} parent=51 // pred_check_branch
          %478 = sbr.rel (%p476) target = $region56
        $region55: #{tpu_custom_call.1} parent=51 // pred_region
          %s479 = sand.u32 %s141, 1
          %s480 = scalar_lea.sflag [#allocation4], %s479
          %s481 = sand.u32 %s141, 1
          %s482 = smul.addr %s481, 64
          %s483 = scalar_lea.vmem [#allocation5], %s482
          %485 = dma.done %s480, 1024
        $region56: #{tpu_custom_call.1} parent=51 // pred_fallthru
          _
      $region52: #{tpu_custom_call.1} parent=5 // pred_fallthru
        _
    $region6: #{tpu_custom_call.1} parent=1 // loop_footer
      %s21 = sadd.s32 1, %s17
    $region7: #{tpu_custom_call.1} parent=1 // loop_footer_branch
      %16 = sbr.rel target = $region3
    $region8: #{tpu_custom_call.1} parent=1 // loop_exit
      _
    %486 = vsyncpa [#allocation3], 1
    %s487 = scalar_lea.sflag [#allocation3], 1
    %488 = vsyncpa %s487, 1
    %489 = vsyncpa [#allocation4], 1
    %s490 = scalar_lea.sflag [#allocation4], 1
    %491 = vsyncpa %s490, 1

</llo_original>
